<compile_context>
chip_gen: v5e
topology: v5e:2x2
jax: 0.10.0
libtpu: 0.0.40
codegen_flags: <defaults>
</compile_context>

<pallas_src>
import jax
import jax.numpy as jnp
from jax import lax
from jax.experimental import pallas as pl
from jax.experimental.pallas import tpu as pltpu

_LANE = 128     # last-dim (lane) padding
_SUBLANE = 8    # second-to-last-dim (sublane) padding


def _round_up(x, m):
    return (x + m - 1) // m * m


def _pad2d(a, rows, cols):
    return jnp.pad(a, ((0, rows - a.shape[0]), (0, cols - a.shape[1])))


# ---------------------------------------------------------------------------
# Fused kernel: pre-pass sampled v->h layers  +  top-RBM CD-k Gibbs chain
# ---------------------------------------------------------------------------
def _build_dbn_kernel(num_pre, cd_k):
    def kernel(*refs):
        pos = 0
        v_ref = refs[pos]
        pos += 1
        pre_refs = []
        for _ in range(num_pre):
            pre_refs.append((refs[pos], refs[pos + 1], refs[pos + 2]))  # (wT, hb, u)
            pos += 3
        wT_ref, w_ref, vb_ref, hb_ref, uh_ref, uv_ref = refs[pos:pos + 6]
        pos += 6
        v_top_ref, v_neg_ref = refs[pos], refs[pos + 1]

        # ---- pre-pass layers: v = bernoulli(sigmoid(v @ W_i.T + h_bias_i)) ----
        x = v_ref[...]                                       # f32, values in {0,1}
        for wTi_ref, hbi_ref, ui_ref in pre_refs:
            logits = jnp.dot(x.astype(jnp.bfloat16), wTi_ref[...],
                             preferred_element_type=jnp.float32) + hbi_ref[...]
            x = (ui_ref[...] < jax.nn.sigmoid(logits)).astype(jnp.float32)

        v_top_ref[...] = x          # "v": visible input handed to the top RBM

        # ---- top RBM: CD-k Gibbs chain -----------------------------------------
        tb = x.shape[0]
        wT = wT_ref[...]            # bf16 [nv_p, nh_p]   (v -> h direction)
        w = w_ref[...]              # bf16 [nh_p, nv_p]   (h -> v direction)
        n_h = wT.shape[1]
        n_v = w.shape[1]
        # hoist the (1, n) bias broadcasts out of the Gibbs loop
        hb = jnp.broadcast_to(hb_ref[...], (tb, n_h))
        vb = jnp.broadcast_to(vb_ref[...], (tb, n_v))

        p_h = jax.nn.sigmoid(
            jnp.dot(x.astype(jnp.bfloat16), wT,
                    preferred_element_type=jnp.float32) + hb)
        h0 = (uh_ref[0] < p_h).astype(jnp.float32)

        def gibbs_step(k, carry):
            h, _ = carry
            p_v = jax.nn.sigmoid(
                jnp.dot(h.astype(jnp.bfloat16), w,
                        preferred_element_type=jnp.float32) + vb)
            v_neg = (uv_ref[k] < p_v).astype(jnp.float32)
            p_hk = jax.nn.sigmoid(
                jnp.dot(v_neg.astype(jnp.bfloat16), wT,
                        preferred_element_type=jnp.float32) + hb)
            h_new = (uh_ref[k + 1] < p_hk).astype(jnp.float32)
            return h_new, v_neg

        _, v_neg = lax.fori_loop(0, cd_k, gibbs_step, (h0, x))
        v_neg_ref[...] = v_neg

    return kernel


# ---------------------------------------------------------------------------
# Wrapper: padding, batch tiling, BlockSpecs, single pallas_call
# ---------------------------------------------------------------------------
def dbn_forward(params, v_input, ith_layer, CD_k=10, key=None,
                max_batch_tile=512, vmem_budget_bytes=8 * 1024 * 1024):
    """Pallas DBN forward. Returns (v, v_) exactly like the PyTorch module."""
    if key is None:
        key = jax.random.PRNGKey(0)
    assert CD_k >= 1
    assert 0 <= ith_layer < len(params)
    num_pre = ith_layer
    B, n_in0 = v_input.shape
    n_in0_p = _round_up(n_in0, _LANE)

    # --- pre-pass layer params: pre-transposed, zero-padded, bf16 weights -------
    pre_args = []       # (wT bf16 [nin_p, nh_p], h_bias f32 [1, nh_p], nh_p)
    for i in range(num_pre):
        W, _vb, hb = params[i]
        nh, nin = W.shape
        nin_p, nh_p = _round_up(nin, _LANE), _round_up(nh, _LANE)
        wT = _pad2d(W, nh_p, nin_p).T.astype(jnp.bfloat16)
        hb_p = _pad2d(hb.reshape(1, -1), 1, nh_p).astype(jnp.float32)
        pre_args.append((wT, hb_p, nh_p))

    # --- top RBM params ----------------------------------------------------------
    W_t, vb_t, hb_t = params[ith_layer]
    nh_t, nv_t = W_t.shape
    nv_tp, nh_tp = _round_up(nv_t, _LANE), _round_up(nh_t, _LANE)
    W_tp = _pad2d(W_t, nh_tp, nv_tp)
    wT_top = W_tp.T.astype(jnp.bfloat16)        # [nv_tp, nh_tp]  v -> h
    w_top = W_tp.astype(jnp.bfloat16)           # [nh_tp, nv_tp]  h -> v
    vb_top = _pad2d(vb_t.reshape(1, -1), 1, nv_tp).astype(jnp.float32)
    hb_top = _pad2d(hb_t.reshape(1, -1), 1, nh_tp).astype(jnp.float32)

    # --- batch tile sized so the double-buffered streamed blocks fit VMEM -------
    # (conservative budget works on v7x's 64 MiB VMEM as well as v5e/v6e)
    per_row = n_in0_p * 4
    for _, _, nh_p in pre_args:
        per_row += nh_p * 4
    per_row += (CD_k + 1) * nh_tp * 4 + CD_k * nv_tp * 4 + 2 * nv_tp * 4
    tb = vmem_budget_bytes // (2 * per_row)
    tb = max(_SUBLANE, min(max_batch_tile, (tb // _SUBLANE) * _SUBLANE))
    tb = min(tb, _round_up(B, _SUBLANE))
    B_p = _round_up(B, tb)
    grid = (B_p // tb,)

    # --- kernel inputs -----------------------------------------------------------
    v_p = _pad2d(v_input.astype(jnp.float32), B_p, n_in0_p)
    keys = jax.random.split(key, num_pre + 2)
    pre_u = [jax.random.uniform(keys[i], (B_p, pre_args[i][2]), dtype=jnp.float32)
             for i in range(num_pre)]
    u_h = jax.random.uniform(keys[num_pre], (CD_k + 1, B_p, nh_tp), dtype=jnp.float32)
    u_v = jax.random.uniform(keys[num_pre + 1], (CD_k, B_p, nv_tp), dtype=jnp.float32)

    # --- BlockSpecs --------------------------------------------------------------
    def resident(shape):  # weights / biases: stay resident across all batch tiles
        return pl.BlockSpec(shape, lambda i: (0,) * len(shape))

    in_specs = [pl.BlockSpec((tb, n_in0_p), lambda i: (i, 0))]
    args = [v_p]
    for li, (wT, hb_p, nh_p) in enumerate(pre_args):
        in_specs += [resident(wT.shape), resident(hb_p.shape),
                     pl.BlockSpec((tb, nh_p), lambda i: (i, 0))]
        args += [wT, hb_p, pre_u[li]]
    in_specs += [resident(wT_top.shape), resident(w_top.shape),
                 resident(vb_top.shape), resident(hb_top.shape),
                 pl.BlockSpec((CD_k + 1, tb, nh_tp), lambda i: (0, i, 0)),
                 pl.BlockSpec((CD_k, tb, nv_tp), lambda i: (0, i, 0))]
    args += [wT_top, w_top, vb_top, hb_top, u_h, u_v]

    out_specs = (pl.BlockSpec((tb, nv_tp), lambda i: (i, 0)),
                 pl.BlockSpec((tb, nv_tp), lambda i: (i, 0)))
    out_shape = (jax.ShapeDtypeStruct((B_p, nv_tp), jnp.float32),
                 jax.ShapeDtypeStruct((B_p, nv_tp), jnp.float32))

    v_top_p, v_neg_p = pl.pallas_call(
        _build_dbn_kernel(num_pre, CD_k),
        grid=grid,
        in_specs=in_specs,
        out_specs=out_specs,
        out_shape=out_shape,
        compiler_params=pltpu.CompilerParams(
            dimension_semantics=("parallel",)),   # shards batch across TCs on v7x
    )(*args)

    return v_top_p[:B, :nv_t], v_neg_p[:B, :nv_t]


# ---------------------------------------------------------------------------
# DBN parameter init (matches the PyTorch __init__ shapes / distributions)
# ---------------------------------------------------------------------------
def init_dbn_params(key, n_visible, n_hidden):
    """Returns list of (W [nh, nv], v_bias [nv], h_bias [nh]) per RBM layer."""
    params = []
    in_size = n_visible
    for nh in n_hidden:
        key, sub = jax.random.split(key)
        bound = 1.0 / (in_size + nh)
        W = jax.random.uniform(sub, (nh, in_size), minval=-bound, maxval=bound,
                               dtype=jnp.float32)
        params.append((W, jnp.zeros((in_size,), jnp.float32),
                       jnp.zeros((nh,), jnp.float32)))
        in_size = nh
    # W_rec / W_gen / bias_rec / bias_gen in the PyTorch module are clones /
    # aliases of the RBM parameters and are not used in forward().
    return params


# ---------------------------------------------------------------------------
if __name__ == "__main__":
    key = jax.random.PRNGKey(0)

    # small shapes consistent with the module defaults (scaled down)
    B = 16
    n_visible = 96
    n_hidden = [64, 48]
    CD_k = 10
    ith_layer = 1       # one sampled v->h pre-pass, CD-k chain on rbm_layers[1]

    kp, kx, ku = jax.random.split(key, 3)
    params = init_dbn_params(kp, n_visible, n_hidden)
    v_input = (jax.random.uniform(kx, (B, n_visible)) > 0.5).astype(jnp.float32)

    v_top, v_neg = dbn_forward(params, v_input, ith_layer=ith_layer,
                               CD_k=CD_k, key=ku)
    jax.block_until_ready((v_top, v_neg))

    assert v_top.shape == (B, n_hidden[ith_layer - 1])
    assert v_neg.shape == (B, n_hidden[ith_layer - 1])
    assert bool(jnp.all((v_top == 0.0) | (v_top == 1.0)))
    assert bool(jnp.all((v_neg == 0.0) | (v_neg == 1.0)))
    print("KERNEL_OK")
</pallas_src>

<mosaic_0001>
module attributes {stable_mosaic.version = 11 : i64} {
  func.func @kernel(%arg0: i32, %arg1: memref<16x128xf32, #tpu.memory_space<vmem>>, %arg2: memref<128x128xbf16, #tpu.memory_space<vmem>>, %arg3: memref<1x128xf32, #tpu.memory_space<vmem>>, %arg4: memref<16x128xf32, #tpu.memory_space<vmem>>, %arg5: memref<128x128xbf16, #tpu.memory_space<vmem>>, %arg6: memref<128x128xbf16, #tpu.memory_space<vmem>>, %arg7: memref<1x128xf32, #tpu.memory_space<vmem>>, %arg8: memref<1x128xf32, #tpu.memory_space<vmem>>, %arg9: memref<11x16x128xf32, #tpu.memory_space<vmem>>, %arg10: memref<10x16x128xf32, #tpu.memory_space<vmem>>, %arg11: memref<16x128xf32, #tpu.memory_space<vmem>>, %arg12: memref<16x128xf32, #tpu.memory_space<vmem>>) attributes {dimension_semantics = [#tpu.dimension_semantics<parallel>], iteration_bounds = array<i64: 1>, scalar_prefetch = 0 : i64, scratch_operands = 0 : i64, tpu.core_type = #tpu.core_type<tc>, window_params = [{transform_indices = @transform_0, window_bounds = array<i64: 16, 128>}, {pipeline_mode = #tpu.pipeline_mode<synchronous>, transform_indices = @transform_1, window_bounds = array<i64: 128, 128>}, {pipeline_mode = #tpu.pipeline_mode<synchronous>, transform_indices = @transform_2, window_bounds = array<i64: 1, 128>}, {transform_indices = @transform_3, window_bounds = array<i64: 16, 128>}, {pipeline_mode = #tpu.pipeline_mode<synchronous>, transform_indices = @transform_4, window_bounds = array<i64: 128, 128>}, {pipeline_mode = #tpu.pipeline_mode<synchronous>, transform_indices = @transform_5, window_bounds = array<i64: 128, 128>}, {pipeline_mode = #tpu.pipeline_mode<synchronous>, transform_indices = @transform_6, window_bounds = array<i64: 1, 128>}, {pipeline_mode = #tpu.pipeline_mode<synchronous>, transform_indices = @transform_7, window_bounds = array<i64: 1, 128>}, {transform_indices = @transform_8, window_bounds = array<i64: 11, 16, 128>}, {transform_indices = @transform_9, window_bounds = array<i64: 10, 16, 128>}, {transform_indices = @transform_10, window_bounds = array<i64: 16, 128>}, {transform_indices = @transform_11, window_bounds = array<i64: 16, 128>}]} {
    %c0 = arith.constant 0 : index
    %c0_0 = arith.constant 0 : index
    %0 = vector.load %arg1[%c0, %c0_0] : memref<16x128xf32, #tpu.memory_space<vmem>>, vector<16x128xf32>
    %1 = arith.truncf %0 : vector<16x128xf32> to vector<16x128xbf16>
    %c0_1 = arith.constant 0 : index
    %c0_2 = arith.constant 0 : index
    %2 = vector.load %arg2[%c0_1, %c0_2] : memref<128x128xbf16, #tpu.memory_space<vmem>>, vector<128x128xbf16>
    %cst = arith.constant dense<0.000000e+00> : vector<16x128xf32>
    %3 = tpu.matmul %1, %2, %cst {dimension_numbers = #tpu.dot_dimension_numbers<[1], [0], [0], [1], [0, 0, 1, 1], [], []>} : vector<16x128xbf16>, vector<128x128xbf16>, vector<16x128xf32> -> vector<16x128xf32>
    %c0_3 = arith.constant 0 : index
    %c0_4 = arith.constant 0 : index
    %4 = vector.load %arg3[%c0_3, %c0_4] : memref<1x128xf32, #tpu.memory_space<vmem>>, vector<1x128xf32>
    %5 = vector.broadcast %4 : vector<1x128xf32> to vector<16x128xf32>
    %6 = arith.addf %3, %5 : vector<16x128xf32>
    %c0_5 = arith.constant 0 : index
    %c0_6 = arith.constant 0 : index
    %7 = vector.load %arg4[%c0_5, %c0_6] : memref<16x128xf32, #tpu.memory_space<vmem>>, vector<16x128xf32>
    %8 = arith.negf %6 : vector<16x128xf32>
    %9 = math.exp %8 : vector<16x128xf32>
    %cst_7 = arith.constant 1.000000e+00 : f32
    %10 = vector.broadcast %cst_7 : f32 to vector<16x128xf32>
    %11 = arith.addf %10, %9 : vector<16x128xf32>
    %12 = arith.divf %10, %11 : vector<16x128xf32>
    %13 = arith.cmpf olt, %7, %12 : vector<16x128xf32>
    %14 = arith.extui %13 : vector<16x128xi1> to vector<16x128xi32>
    %15 = arith.sitofp %14 : vector<16x128xi32> to vector<16x128xf32>
    %c0_8 = arith.constant 0 : index
    %c0_9 = arith.constant 0 : index
    %16 = vector.load %arg11[%c0_8, %c0_9] : memref<16x128xf32, #tpu.memory_space<vmem>>, vector<16x128xf32>
    tpu.vector_store %arg11[%c0_8, %c0_9], %15 {strides = array<i32>} : memref<16x128xf32, #tpu.memory_space<vmem>>, vector<16x128xf32>,
    %c0_10 = arith.constant 0 : index
    %c0_11 = arith.constant 0 : index
    %17 = vector.load %arg5[%c0_10, %c0_11] : memref<128x128xbf16, #tpu.memory_space<vmem>>, vector<128x128xbf16>
    %c0_12 = arith.constant 0 : index
    %c0_13 = arith.constant 0 : index
    %18 = vector.load %arg6[%c0_12, %c0_13] : memref<128x128xbf16, #tpu.memory_space<vmem>>, vector<128x128xbf16>
    %c0_14 = arith.constant 0 : index
    %c0_15 = arith.constant 0 : index
    %19 = vector.load %arg8[%c0_14, %c0_15] : memref<1x128xf32, #tpu.memory_space<vmem>>, vector<1x128xf32>
    %20 = vector.shape_cast %19 : vector<1x128xf32> to vector<1x128xf32>
    %21 = vector.broadcast %20 : vector<1x128xf32> to vector<16x128xf32>
    %c0_16 = arith.constant 0 : index
    %c0_17 = arith.constant 0 : index
    %22 = vector.load %arg7[%c0_16, %c0_17] : memref<1x128xf32, #tpu.memory_space<vmem>>, vector<1x128xf32>
    %23 = vector.shape_cast %22 : vector<1x128xf32> to vector<1x128xf32>
    %24 = vector.broadcast %23 : vector<1x128xf32> to vector<16x128xf32>
    %25 = arith.truncf %15 : vector<16x128xf32> to vector<16x128xbf16>
    %cst_18 = arith.constant dense<0.000000e+00> : vector<16x128xf32>
    %26 = tpu.matmul %25, %17, %cst_18 {dimension_numbers = #tpu.dot_dimension_numbers<[1], [0], [0], [1], [0, 0, 1, 1], [], []>} : vector<16x128xbf16>, vector<128x128xbf16>, vector<16x128xf32> -> vector<16x128xf32>
    %27 = arith.addf %26, %21 : vector<16x128xf32>
    %28 = arith.negf %27 : vector<16x128xf32>
    %29 = math.exp %28 : vector<16x128xf32>
    %cst_19 = arith.constant 1.000000e+00 : f32
    %30 = vector.broadcast %cst_19 : f32 to vector<16x128xf32>
    %31 = arith.addf %30, %29 : vector<16x128xf32>
    %32 = arith.divf %30, %31 : vector<16x128xf32>
    %c0_20 = arith.constant 0 : index
    %c0_21 = arith.constant 0 : index
    %c0_22 = arith.constant 0 : index
    %33 = vector.load %arg9[%c0_20, %c0_21, %c0_22] : memref<11x16x128xf32, #tpu.memory_space<vmem>>, vector<1x16x128xf32>
    %34 = vector.shape_cast %33 : vector<1x16x128xf32> to vector<16x128xf32>
    %35 = arith.cmpf olt, %34, %32 : vector<16x128xf32>
    %36 = arith.extui %35 : vector<16x128xi1> to vector<16x128xi32>
    %37 = arith.sitofp %36 : vector<16x128xi32> to vector<16x128xf32>
    %c0_i32 = arith.constant 0 : i32
    %c10_i32 = arith.constant 10 : i32
    %38 = arith.addi %c0_i32, %c10_i32 : i32
    %c1_i32 = arith.constant 1 : i32
    %39:2 = scf.for %arg13 = %c0_i32 to %38 step %c1_i32 iter_args(%arg14 = %37, %arg15 = %15) -> (vector<16x128xf32>, vector<16x128xf32>)  : i32 {
      %41 = arith.truncf %arg14 : vector<16x128xf32> to vector<16x128xbf16>
      %cst_26 = arith.constant dense<0.000000e+00> : vector<16x128xf32>
      %42 = tpu.matmul %41, %18, %cst_26 {dimension_numbers = #tpu.dot_dimension_numbers<[1], [0], [0], [1], [0, 0, 1, 1], [], []>} : vector<16x128xbf16>, vector<128x128xbf16>, vector<16x128xf32> -> vector<16x128xf32>
      %43 = arith.addf %42, %24 : vector<16x128xf32>
      %44 = arith.negf %43 : vector<16x128xf32>
      %45 = math.exp %44 : vector<16x128xf32>
      %cst_27 = arith.constant 1.000000e+00 : f32
      %46 = vector.broadcast %cst_27 : f32 to vector<16x128xf32>
      %47 = arith.addf %46, %45 : vector<16x128xf32>
      %48 = arith.divf %46, %47 : vector<16x128xf32>
      %49 = arith.index_cast %arg13 : i32 to index
      %c0_28 = arith.constant 0 : index
      %c0_29 = arith.constant 0 : index
      %50 = vector.load %arg10[%49, %c0_28, %c0_29] : memref<10x16x128xf32, #tpu.memory_space<vmem>>, vector<1x16x128xf32>
      %51 = vector.shape_cast %50 : vector<1x16x128xf32> to vector<16x128xf32>
      %52 = arith.cmpf olt, %51, %48 : vector<16x128xf32>
      %53 = arith.extui %52 : vector<16x128xi1> to vector<16x128xi32>
      %54 = arith.sitofp %53 : vector<16x128xi32> to vector<16x128xf32>
      %55 = arith.truncf %54 : vector<16x128xf32> to vector<16x128xbf16>
      %cst_30 = arith.constant dense<0.000000e+00> : vector<16x128xf32>
      %56 = tpu.matmul %55, %17, %cst_30 {dimension_numbers = #tpu.dot_dimension_numbers<[1], [0], [0], [1], [0, 0, 1, 1], [], []>} : vector<16x128xbf16>, vector<128x128xbf16>, vector<16x128xf32> -> vector<16x128xf32>
      %57 = arith.addf %56, %21 : vector<16x128xf32>
      %58 = arith.negf %57 : vector<16x128xf32>
      %59 = math.exp %58 : vector<16x128xf32>
      %cst_31 = arith.constant 1.000000e+00 : f32
      %60 = vector.broadcast %cst_31 : f32 to vector<16x128xf32>
      %61 = arith.addf %60, %59 : vector<16x128xf32>
      %62 = arith.divf %60, %61 : vector<16x128xf32>
      %c1_i32_32 = arith.constant 1 : i32
      %63 = arith.addi %arg13, %c1_i32_32 : i32
      %64 = arith.index_cast %63 : i32 to index
      %c0_33 = arith.constant 0 : index
      %c0_34 = arith.constant 0 : index
      %65 = vector.load %arg9[%64, %c0_33, %c0_34] : memref<11x16x128xf32, #tpu.memory_space<vmem>>, vector<1x16x128xf32>
      %66 = vector.shape_cast %65 : vector<1x16x128xf32> to vector<16x128xf32>
      %67 = arith.cmpf olt, %66, %62 : vector<16x128xf32>
      %68 = arith.extui %67 : vector<16x128xi1> to vector<16x128xi32>
      %69 = arith.sitofp %68 : vector<16x128xi32> to vector<16x128xf32>
      scf.yield %69, %54 : vector<16x128xf32>, vector<16x128xf32>
    }
    %c10_i32_23 = arith.constant 10 : i32
    %c0_24 = arith.constant 0 : index
    %c0_25 = arith.constant 0 : index
    %40 = vector.load %arg12[%c0_24, %c0_25] : memref<16x128xf32, #tpu.memory_space<vmem>>, vector<16x128xf32>
    tpu.vector_store %arg12[%c0_24, %c0_25], %39#1 {strides = array<i32>} : memref<16x128xf32, #tpu.memory_space<vmem>>, vector<16x128xf32>,
    return
  }
  func.func @transform_0(%arg0: i32) -> (i32, i32) {
    %c0_i32 = arith.constant 0 : i32
    %c0_i32_0 = arith.constant 0 : i32
    return %arg0, %c0_i32 : i32, i32
  }
  func.func @transform_1(%arg0: i32) -> (i32, i32) {
    %c0_i32 = arith.constant 0 : i32
    %c0_i32_0 = arith.constant 0 : i32
    %c0_i32_1 = arith.constant 0 : i32
    return %c0_i32, %c0_i32_0 : i32, i32
  }
  func.func @transform_2(%arg0: i32) -> (i32, i32) {
    %c0_i32 = arith.constant 0 : i32
    %c0_i32_0 = arith.constant 0 : i32
    %c0_i32_1 = arith.constant 0 : i32
    return %c0_i32, %c0_i32_0 : i32, i32
  }
  func.func @transform_3(%arg0: i32) -> (i32, i32) {
    %c0_i32 = arith.constant 0 : i32
    %c0_i32_0 = arith.constant 0 : i32
    return %arg0, %c0_i32 : i32, i32
  }
  func.func @transform_4(%arg0: i32) -> (i32, i32) {
    %c0_i32 = arith.constant 0 : i32
    %c0_i32_0 = arith.constant 0 : i32
    %c0_i32_1 = arith.constant 0 : i32
    return %c0_i32, %c0_i32_0 : i32, i32
  }
  func.func @transform_5(%arg0: i32) -> (i32, i32) {
    %c0_i32 = arith.constant 0 : i32
    %c0_i32_0 = arith.constant 0 : i32
    %c0_i32_1 = arith.constant 0 : i32
    return %c0_i32, %c0_i32_0 : i32, i32
  }
  func.func @transform_6(%arg0: i32) -> (i32, i32) {
    %c0_i32 = arith.constant 0 : i32
    %c0_i32_0 = arith.constant 0 : i32
    %c0_i32_1 = arith.constant 0 : i32
    return %c0_i32, %c0_i32_0 : i32, i32
  }
  func.func @transform_7(%arg0: i32) -> (i32, i32) {
    %c0_i32 = arith.constant 0 : i32
    %c0_i32_0 = arith.constant 0 : i32
    %c0_i32_1 = arith.constant 0 : i32
    return %c0_i32, %c0_i32_0 : i32, i32
  }
  func.func @transform_8(%arg0: i32) -> (i32, i32, i32) {
    %c0_i32 = arith.constant 0 : i32
    %c0_i32_0 = arith.constant 0 : i32
    %c0_i32_1 = arith.constant 0 : i32
    return %c0_i32, %arg0, %c0_i32_0 : i32, i32, i32
  }
  func.func @transform_9(%arg0: i32) -> (i32, i32, i32) {
    %c0_i32 = arith.constant 0 : i32
    %c0_i32_0 = arith.constant 0 : i32
    %c0_i32_1 = arith.constant 0 : i32
    return %c0_i32, %arg0, %c0_i32_0 : i32, i32, i32
  }
  func.func @transform_10(%arg0: i32) -> (i32, i32) {
    %c0_i32 = arith.constant 0 : i32
    %c0_i32_0 = arith.constant 0 : i32
    return %arg0, %c0_i32 : i32, i32
  }
  func.func @transform_11(%arg0: i32) -> (i32, i32) {
    %c0_i32 = arith.constant 0 : i32
    %c0_i32_0 = arith.constant 0 : i32
    return %arg0, %c0_i32 : i32, i32
  }
}

</mosaic_0001>

<llo_original>
// kernel: tpu_custom_call.1
$region0: #{tpu_custom_call.1}
  #allocation0 [shape = 'u32[]', space=smem, size = 0x4, offset = 0x4, fixed_abs, tag = 'smem constant byte address 0x4 - core index']
  #allocation1 [shape = 'u32[72,128]{1,0:T(1,128)}', space=vmem, size = 0x9000, scoped, tag = 'internal scratch']
  %s0 = inlined_call_operand.hbm [shape: f32[16,128], index: 0, kind: input, shape index: {}]
  %s1 = inlined_call_operand.hbm [shape: bf16[128,128], index: 1, kind: input, shape index: {}]
  %s2 = inlined_call_operand.vmem [shape: f32[1,128], index: 2, kind: input, shape index: {}]
  %s3 = inlined_call_operand.hbm [shape: f32[16,128], index: 3, kind: input, shape index: {}]
  %s4 = inlined_call_operand.hbm [shape: bf16[128,128], index: 4, kind: input, shape index: {}]
  %s5 = inlined_call_operand.hbm [shape: bf16[128,128], index: 5, kind: input, shape index: {}]
  %s6 = inlined_call_operand.vmem [shape: f32[1,128], index: 6, kind: input, shape index: {}]
  %s7 = inlined_call_operand.vmem [shape: f32[1,128], index: 7, kind: input, shape index: {}]
  %s8 = inlined_call_operand.hbm [shape: f32[11,16,128], index: 8, kind: input, shape index: {}]
  %s9 = inlined_call_operand.hbm [shape: f32[10,16,128], index: 9, kind: input, shape index: {}]
  %s10 = inlined_call_operand.hbm [shape: f32[16,128], index: 10, kind: output, shape index: {0}]
  %s11 = inlined_call_operand.hbm [shape: f32[16,128], index: 11, kind: output, shape index: {1}]
  %12 = xla_tuple %s10, %s11
  %s13 = sld [smem:[#allocation0]]
  $region93: #{tpu_custom_call.1} parent=0
    _
  %s15 = ssub.s32 1, %s13
  %s16 = scalar_select 0, %s15, %s13
  $region1: #{tpu_custom_call.1} parent=0
    #allocation2 [shape = 'u8[8192]{0}', space=vmem, size = 0x2000, scoped, tag = 'input window, operand 0, single buffered']
    #allocation3 [shape = 's32[1]{0}', space=sflag, size = 0x4, scoped, tag = 'scoped memory for tpu_custom_call.1']
    #allocation4 [shape = 's32[1]{0}', space=sflag, size = 0x4, scoped, tag = 'scoped memory for tpu_custom_call.1']
    #allocation5 [shape = 'u8[32768]{0}', space=vmem, size = 0x8000, scoped, tag = 'input window, operand 1, single buffered']
    #allocation6 [shape = 's32[1]{0}', space=sflag, size = 0x4, scoped, tag = 'scoped memory for tpu_custom_call.1']
    #allocation7 [shape = 'u8[8192]{0}', space=vmem, size = 0x2000, scoped, tag = 'input window, operand 3, single buffered']
    #allocation8 [shape = 'u8[32768]{0}', space=vmem, size = 0x8000, scoped, tag = 'input window, operand 4, single buffered']
    #allocation9 [shape = 's32[1]{0}', space=sflag, size = 0x4, scoped, tag = 'scoped memory for tpu_custom_call.1']
    #allocation10 [shape = 'u8[32768]{0}', space=vmem, size = 0x8000, scoped, tag = 'input window, operand 5, single buffered']
    #allocation11 [shape = 'u8[90112]{0}', space=vmem, size = 0x16000, scoped, tag = 'input window, operand 8, single buffered']
    #allocation12 [shape = 's32[1]{0}', space=sflag, size = 0x4, scoped, tag = 'scoped memory for tpu_custom_call.1']
    #allocation13 [shape = 'u8[81920]{0}', space=vmem, size = 0x14000, scoped, tag = 'input window, operand 9, single buffered']
    #allocation14 [shape = 'u8[8192]{0}', space=vmem, size = 0x2000, scoped, tag = 'output window, operand 0, single buffered']
    #allocation15 [shape = 'u8[8192]{0}', space=vmem, size = 0x2000, scoped, tag = 'output window, operand 1, single buffered']
    #allocation16 [shape = 's32[1]{0}', space=sflag, size = 0x4, scoped, tag = 'scoped memory for tpu_custom_call.1']
    %17 = vsyncpa [#allocation3], 0
    %18 = vsyncpa [#allocation6], 0
    %19 = vsyncpa [#allocation9], 0
    %20 = vsyncpa [#allocation12], 0
    %21 = vsyncpa [#allocation4], 0
    %22 = vsyncpa [#allocation16], 0
    // Predicated region
    $region2: #{tpu_custom_call.1} parent=1 // pred_check
      _
    $region3: #{tpu_custom_call.1} parent=1 // pred_check_branch
      %24 = sbr.rel (0) target = $region5
    $region4: #{tpu_custom_call.1} parent=1 // pred_region
      %26 = vsyncadd [#allocation3], 0
      %s27 = sshll.u32 %s0, 4
      %s28 = int_to_ptr.hbm [resolvable:$true] %s27
      %s29 = sshll.u32 [#allocation2], 4
      %s30 = int_to_ptr.vmem [resolvable:$true] %s29
      %35 = dma.hbm_to_vmem [thread:$0]  %s28, 256, %s30, [#allocation3], 128, 128, 8
    $region5: #{tpu_custom_call.1} parent=1 // pred_fallthru
      _
    // Predicated region
    $region6: #{tpu_custom_call.1} parent=1 // pred_check
      _
    $region7: #{tpu_custom_call.1} parent=1 // pred_check_branch
      %37 = sbr.rel (0) target = $region9
    $region8: #{tpu_custom_call.1} parent=1 // pred_region
      %39 = vsyncadd [#allocation6], 0
      %s40 = sshll.u32 %s1, 4
      %s41 = int_to_ptr.hbm [resolvable:$true] %s40
      %s42 = sshll.u32 [#allocation5], 4
      %s43 = int_to_ptr.vmem [resolvable:$true] %s42
      %48 = dma.hbm_to_vmem [thread:$0]  %s41, 1024, %s43, [#allocation6], 64, 64, 4
    $region9: #{tpu_custom_call.1} parent=1 // pred_fallthru
      _
    // Predicated region
    $region10: #{tpu_custom_call.1} parent=1 // pred_check
      _
    $region11: #{tpu_custom_call.1} parent=1 // pred_check_branch
      %50 = sbr.rel (0) target = $region13
    $region12: #{tpu_custom_call.1} parent=1 // pred_region
      _
    $region13: #{tpu_custom_call.1} parent=1 // pred_fallthru
      _
    // Predicated region
    $region14: #{tpu_custom_call.1} parent=1 // pred_check
      _
    $region15: #{tpu_custom_call.1} parent=1 // pred_check_branch
      %52 = sbr.rel (0) target = $region17
    $region16: #{tpu_custom_call.1} parent=1 // pred_region
      %54 = vsyncadd [#allocation6], 0
      %s55 = sshll.u32 %s3, 4
      %s56 = int_to_ptr.hbm [resolvable:$true] %s55
      %s57 = sshll.u32 [#allocation7], 4
      %s58 = int_to_ptr.vmem [resolvable:$true] %s57
      %63 = dma.hbm_to_vmem [thread:$0]  %s56, 256, %s58, [#allocation6], 128, 128, 8
    $region17: #{tpu_custom_call.1} parent=1 // pred_fallthru
      _
    // Predicated region
    $region18: #{tpu_custom_call.1} parent=1 // pred_check
      _
    $region19: #{tpu_custom_call.1} parent=1 // pred_check_branch
      %65 = sbr.rel (0) target = $region21
    $region20: #{tpu_custom_call.1} parent=1 // pred_region
      %67 = vsyncadd [#allocation9], 0
      %s68 = sshll.u32 %s4, 4
      %s69 = int_to_ptr.hbm [resolvable:$true] %s68
      %s70 = sshll.u32 [#allocation8], 4
      %s71 = int_to_ptr.vmem [resolvable:$true] %s70
      %76 = dma.hbm_to_vmem [thread:$0]  %s69, 1024, %s71, [#allocation9], 64, 64, 4
    $region21: #{tpu_custom_call.1} parent=1 // pred_fallthru
      _
    // Predicated region
    $region22: #{tpu_custom_call.1} parent=1 // pred_check
      _
    $region23: #{tpu_custom_call.1} parent=1 // pred_check_branch
      %78 = sbr.rel (0) target = $region25
    $region24: #{tpu_custom_call.1} parent=1 // pred_region
      %80 = vsyncadd [#allocation9], 0
      %s81 = sshll.u32 %s5, 4
      %s82 = int_to_ptr.hbm [resolvable:$true] %s81
      %s83 = sshll.u32 [#allocation10], 4
      %s84 = int_to_ptr.vmem [resolvable:$true] %s83
      %89 = dma.hbm_to_vmem [thread:$0]  %s82, 1024, %s84, [#allocation9], 64, 64, 4
    $region25: #{tpu_custom_call.1} parent=1 // pred_fallthru
      _
    // Predicated region
    $region26: #{tpu_custom_call.1} parent=1 // pred_check
      _
    $region27: #{tpu_custom_call.1} parent=1 // pred_check_branch
      %91 = sbr.rel (0) target = $region29
    $region28: #{tpu_custom_call.1} parent=1 // pred_region
      _
    $region29: #{tpu_custom_call.1} parent=1 // pred_fallthru
      _
    // Predicated region
    $region30: #{tpu_custom_call.1} parent=1 // pred_check
      _
    $region31: #{tpu_custom_call.1} parent=1 // pred_check_branch
      %93 = sbr.rel (0) target = $region33
    $region32: #{tpu_custom_call.1} parent=1 // pred_region
      _
    $region33: #{tpu_custom_call.1} parent=1 // pred_fallthru
      _
    // Predicated region
    $region34: #{tpu_custom_call.1} parent=1 // pred_check
      _
    $region35: #{tpu_custom_call.1} parent=1 // pred_check_branch
      %95 = sbr.rel (0) target = $region37
    $region36: #{tpu_custom_call.1} parent=1 // pred_region
      %97 = vsyncadd [#allocation12], 0
      %s98 = sshll.u32 %s8, 4
      %s99 = int_to_ptr.hbm [resolvable:$true] %s98
      %s100 = sshll.u32 [#allocation11], 4
      %s101 = int_to_ptr.vmem [resolvable:$true] %s100
      %106 = dma.hbm_to_vmem [thread:$0]  %s99, 2816, %s101, [#allocation12], 128, 128, 8
    $region37: #{tpu_custom_call.1} parent=1 // pred_fallthru
      _
    // Predicated region
    $region38: #{tpu_custom_call.1} parent=1 // pred_check
      _
    $region39: #{tpu_custom_call.1} parent=1 // pred_check_branch
      %108 = sbr.rel (0) target = $region41
    $region40: #{tpu_custom_call.1} parent=1 // pred_region
      %110 = vsyncadd [#allocation12], 0
      %s111 = sshll.u32 %s9, 4
      %s112 = int_to_ptr.hbm [resolvable:$true] %s111
      %s113 = sshll.u32 [#allocation13], 4
      %s114 = int_to_ptr.vmem [resolvable:$true] %s113
      %119 = dma.hbm_to_vmem [thread:$0]  %s112, 2560, %s114, [#allocation12], 128, 128, 8
    $region41: #{tpu_custom_call.1} parent=1 // pred_fallthru
      _
    // Predicated region
    $region42: #{tpu_custom_call.1} parent=1 // pred_check
      _
    $region43: #{tpu_custom_call.1} parent=1 // pred_check_branch
      %121 = sbr.rel (0) target = $region45
    $region44: #{tpu_custom_call.1} parent=1 // pred_region
      %123 = dma.done [#allocation3], 256
    $region45: #{tpu_custom_call.1} parent=1 // pred_fallthru
      _
    // Predicated region
    $region46: #{tpu_custom_call.1} parent=1 // pred_check
      _
    $region47: #{tpu_custom_call.1} parent=1 // pred_check_branch
      %125 = sbr.rel (0) target = $region49
    $region48: #{tpu_custom_call.1} parent=1 // pred_region
      %127 = dma.done [#allocation6], 1024
    $region49: #{tpu_custom_call.1} parent=1 // pred_fallthru
      _
    // Predicated region
    $region50: #{tpu_custom_call.1} parent=1 // pred_check
      _
    $region51: #{tpu_custom_call.1} parent=1 // pred_check_branch
      %129 = sbr.rel (0) target = $region53
    $region52: #{tpu_custom_call.1} parent=1 // pred_region
      %131 = dma.done [#allocation6], 256
    $region53: #{tpu_custom_call.1} parent=1 // pred_fallthru
      _
    // Predicated region
    $region54: #{tpu_custom_call.1} parent=1 // pred_check
      _
    $region55: #{tpu_custom_call.1} parent=1 // pred_check_branch
      %133 = sbr.rel (0) target = $region57
    $region56: #{tpu_custom_call.1} parent=1 // pred_region
      %135 = dma.done [#allocation9], 1024
    $region57: #{tpu_custom_call.1} parent=1 // pred_fallthru
      _
    // Predicated region
    $region58: #{tpu_custom_call.1} parent=1 // pred_check
      _
    $region59: #{tpu_custom_call.1} parent=1 // pred_check_branch
      %137 = sbr.rel (0) target = $region61
    $region60: #{tpu_custom_call.1} parent=1 // pred_region
      %139 = dma.done [#allocation9], 1024
    $region61: #{tpu_custom_call.1} parent=1 // pred_fallthru
      _
    // Predicated region
    $region62: #{tpu_custom_call.1} parent=1 // pred_check
      _
    $region63: #{tpu_custom_call.1} parent=1 // pred_check_branch
      %141 = sbr.rel (0) target = $region65
    $region64: #{tpu_custom_call.1} parent=1 // pred_region
      %143 = dma.done [#allocation12], 2816
    $region65: #{tpu_custom_call.1} parent=1 // pred_fallthru
      _
    // Predicated region
    $region66: #{tpu_custom_call.1} parent=1 // pred_check
      _
    $region67: #{tpu_custom_call.1} parent=1 // pred_check_branch
      %145 = sbr.rel (0) target = $region69
    $region68: #{tpu_custom_call.1} parent=1 // pred_region
      %147 = dma.done [#allocation12], 2560
    $region69: #{tpu_custom_call.1} parent=1 // pred_fallthru
      _
    %v148 = vld [vmem:[#allocation2] sm:$0xff]
    %v149 = vld [vmem:[#allocation2 + $0x8] sm:$0xff]
    %v150 = vpack.c.bf16 %v149, %v148
    %v151 = vld [vmem:[#allocation5] sm:$0xf]
    %v152 = vld [vmem:[#allocation5 + $0x4] sm:$0xf]
    %v153 = vld [vmem:[#allocation5 + $0x8] sm:$0xf]
    %v154 = vld [vmem:[#allocation5 + $0xc] sm:$0xf]
    %v155 = vld [vmem:[#allocation5 + $0x10] sm:$0xf]
    %v156 = vld [vmem:[#allocation5 + $0x14] sm:$0xf]
    %v157 = vld [vmem:[#allocation5 + $0x18] sm:$0xf]
    %v158 = vld [vmem:[#allocation5 + $0x1c] sm:$0xf]
    %v159 = vld [vmem:[#allocation5 + $0x20] sm:$0xf]
    %v160 = vld [vmem:[#allocation5 + $0x24] sm:$0xf]
    %v161 = vld [vmem:[#allocation5 + $0x28] sm:$0xf]
    %v162 = vld [vmem:[#allocation5 + $0x2c] sm:$0xf]
    %v163 = vld [vmem:[#allocation5 + $0x30] sm:$0xf]
    %v164 = vld [vmem:[#allocation5 + $0x34] sm:$0xf]
    %v165 = vld [vmem:[#allocation5 + $0x38] sm:$0xf]
    %v166 = vld [vmem:[#allocation5 + $0x3c] sm:$0xf]
    %v167 = vld [vmem:[%s2] sm:$0x1]
    %v169 = vperm.slane %v167, 0
    %v187 = vunpack.c.l.b16 %v151
    %v188 = vunpack.c.l.b16 %v152
    %v189 = vunpack.c.l.b16 %v153
    %v190 = vunpack.c.l.b16 %v154
    %v191 = vunpack.c.l.b16 %v155
    %v192 = vunpack.c.l.b16 %v156
    %v193 = vunpack.c.l.b16 %v157
    %v194 = vunpack.c.l.b16 %v158
    %v195 = vunpack.c.l.b16 %v159
    %v196 = vunpack.c.l.b16 %v160
    %v197 = vunpack.c.l.b16 %v161
    %v198 = vunpack.c.l.b16 %v162
    %v199 = vunpack.c.l.b16 %v163
    %v200 = vunpack.c.l.b16 %v164
    %v201 = vunpack.c.l.b16 %v165
    %v202 = vunpack.c.l.b16 %v166
    %v203 = vpack.c.b16 %v188, %v187
    %v204 = vpack.c.b16 %v190, %v189
    %v205 = vpack.c.b16 %v192, %v191
    %v206 = vpack.c.b16 %v194, %v193
    %v207 = vpack.c.b16 %v196, %v195
    %v208 = vpack.c.b16 %v198, %v197
    %v209 = vpack.c.b16 %v200, %v199
    %v210 = vpack.c.b16 %v202, %v201
    %219 = vmatpush.bf16.msra.mxu0 %v210
    %220 = vmatpush.bf16.msra.mxu0 %v209
    %221 = vmatpush.bf16.msra.mxu0 %v208
    %222 = vmatpush.bf16.msra.mxu0 %v207
    %223 = vmatpush.bf16.msra.mxu0 %v206
    %224 = vmatpush.bf16.msra.mxu0 %v205
    %225 = vmatpush.bf16.msra.mxu0 %v204
    %226 = vmatpush.bf16.msra.mxu0 %v203
    %227 = vmatmul.bf16.gmra.mxu0 %v150
    %v228 = vpop.f32.mrf.mxu0
    %v229 = vadd.f32 %v169, %v228
    %v230 = vpop.f32.mrf.mxu0
    %v231 = vadd.f32 %v169, %v230
    %232 = vdwg.mxu0
    %v233 = vld [vmem:[#allocation7] sm:$0xff]
    %v234 = vld [vmem:[#allocation7 + $0x8] sm:$0xff]
    %v235 = vxor.u32 %v229, 2147483648
    %v236 = vxor.u32 %v231, 2147483648
    %v237 = vmul.f32 %v235, 1.442695
    %v238 = vpow.pop %v237
    %v239 = vmul.f32 %v236, 1.442695
    %v240 = vpow.pop %v239
    %v241 = vadd.f32 %v238, 1.0
    %v242 = vadd.f32 %v240, 1.0
    %v243 = vrcp.pop %v241
    %v244 = vmul.f32 %v241, %v243
    %v245 = vsub.f32 1.0, %v244
    %v246 = vmul.f32 %v243, %v245
    %v247 = vadd.f32 %v243, %v246
    %vm248 = vweird.f32 %v241
    %vm249 = vweird.f32 %v243
    %vm250 = vmor %vm248, %vm249
    %v251 = vsel %vm250, %v243, %v247
    %v252 = vand.u32 2147483647, %v241
    %vm253 = vcmp.eq.f32.partialorder %v252, 8.507059e+37
    %v254 = vand.u32 %v241, 2147483648
    %v255 = vor.u32 1.1754944e-38, %v254
    %v256 = vsel %vm253, %v255, %v251
    %v257 = vmul.f32 1.0, %v256
    %v258 = vrcp.pop %v242
    %v259 = vmul.f32 %v242, %v258
    %v260 = vsub.f32 1.0, %v259
    %v261 = vmul.f32 %v258, %v260
    %v262 = vadd.f32 %v258, %v261
    %vm263 = vweird.f32 %v242
    %vm264 = vweird.f32 %v258
    %vm265 = vmor %vm263, %vm264
    %v266 = vsel %vm265, %v258, %v262
    %v267 = vand.u32 2147483647, %v242
    %vm268 = vcmp.eq.f32.partialorder %v267, 8.507059e+37
    %v269 = vand.u32 %v242, 2147483648
    %v270 = vor.u32 1.1754944e-38, %v269
    %v271 = vsel %vm268, %v270, %v266
    %v272 = vmul.f32 1.0, %v271
    %vm273 = vcmp.lt.f32.partialorder %v233, %v257
    %vm274 = vcmp.lt.f32.partialorder %v234, %v272
    %v275 = vsel %vm273, 1, 0
    %v276 = vsel %vm274, 1, 0
    %v277 = vcvt.s32.f32 %v275
    %v278 = vcvt.s32.f32 %v276
    %279 = vst [vmem:[#allocation14] sm:$0xff] %v277
    %280 = vst [vmem:[#allocation14 + $0x8] sm:$0xff] %v278
    %v281 = vld [vmem:[#allocation8] sm:$0xf]
    %v282 = vld [vmem:[#allocation8 + $0x4] sm:$0xf]
    %v283 = vld [vmem:[#allocation8 + $0x8] sm:$0xf]
    %v284 = vld [vmem:[#allocation8 + $0xc] sm:$0xf]
    %v285 = vld [vmem:[#allocation8 + $0x10] sm:$0xf]
    %v286 = vld [vmem:[#allocation8 + $0x14] sm:$0xf]
    %v287 = vld [vmem:[#allocation8 + $0x18] sm:$0xf]
    %v288 = vld [vmem:[#allocation8 + $0x1c] sm:$0xf]
    %v289 = vld [vmem:[#allocation8 + $0x20] sm:$0xf]
    %v290 = vld [vmem:[#allocation8 + $0x24] sm:$0xf]
    %v291 = vld [vmem:[#allocation8 + $0x28] sm:$0xf]
    %v292 = vld [vmem:[#allocation8 + $0x2c] sm:$0xf]
    %v293 = vld [vmem:[#allocation8 + $0x30] sm:$0xf]
    %v294 = vld [vmem:[#allocation8 + $0x34] sm:$0xf]
    %v295 = vld [vmem:[#allocation8 + $0x38] sm:$0xf]
    %v296 = vld [vmem:[#allocation8 + $0x3c] sm:$0xf]
    %v297 = vld [vmem:[#allocation10] sm:$0xf]
    %v298 = vld [vmem:[#allocation10 + $0x4] sm:$0xf]
    %v299 = vld [vmem:[#allocation10 + $0x8] sm:$0xf]
    %v300 = vld [vmem:[#allocation10 + $0xc] sm:$0xf]
    %v301 = vld [vmem:[#allocation10 + $0x10] sm:$0xf]
    %v302 = vld [vmem:[#allocation10 + $0x14] sm:$0xf]
    %v303 = vld [vmem:[#allocation10 + $0x18] sm:$0xf]
    %v304 = vld [vmem:[#allocation10 + $0x1c] sm:$0xf]
    %v305 = vld [vmem:[#allocation10 + $0x20] sm:$0xf]
    %v306 = vld [vmem:[#allocation10 + $0x24] sm:$0xf]
    %v307 = vld [vmem:[#allocation10 + $0x28] sm:$0xf]
    %v308 = vld [vmem:[#allocation10 + $0x2c] sm:$0xf]
    %v309 = vld [vmem:[#allocation10 + $0x30] sm:$0xf]
    %v310 = vld [vmem:[#allocation10 + $0x34] sm:$0xf]
    %v311 = vld [vmem:[#allocation10 + $0x38] sm:$0xf]
    %v312 = vld [vmem:[#allocation10 + $0x3c] sm:$0xf]
    %v313 = vld [vmem:[%s7] sm:$0x1]
    %v315 = vperm.slane %v313, 0
    %v317 = vld [vmem:[%s6] sm:$0x1]
    %v319 = vperm.slane %v317, 0
    %v321 = vpack.c.bf16 %v278, %v277
    %v338 = vunpack.c.l.b16 %v281
    %v339 = vunpack.c.l.b16 %v282
    %v340 = vunpack.c.l.b16 %v283
    %v341 = vunpack.c.l.b16 %v284
    %v342 = vunpack.c.l.b16 %v285
    %v343 = vunpack.c.l.b16 %v286
    %v344 = vunpack.c.l.b16 %v287
    %v345 = vunpack.c.l.b16 %v288
    %v346 = vunpack.c.l.b16 %v289
    %v347 = vunpack.c.l.b16 %v290
    %v348 = vunpack.c.l.b16 %v291
    %v349 = vunpack.c.l.b16 %v292
    %v350 = vunpack.c.l.b16 %v293
    %v351 = vunpack.c.l.b16 %v294
    %v352 = vunpack.c.l.b16 %v295
    %v353 = vunpack.c.l.b16 %v296
    %v354 = vpack.c.b16 %v339, %v338
    %v355 = vpack.c.b16 %v341, %v340
    %v356 = vpack.c.b16 %v343, %v342
    %v357 = vpack.c.b16 %v345, %v344
    %v358 = vpack.c.b16 %v347, %v346
    %v359 = vpack.c.b16 %v349, %v348
    %v360 = vpack.c.b16 %v351, %v350
    %v361 = vpack.c.b16 %v353, %v352
    %370 = vmatpush.bf16.msra.mxu0 %v361
    %371 = vmatpush.bf16.msra.mxu0 %v360
    %372 = vmatpush.bf16.msra.mxu0 %v359
    %373 = vmatpush.bf16.msra.mxu0 %v358
    %374 = vmatpush.bf16.msra.mxu0 %v357
    %375 = vmatpush.bf16.msra.mxu0 %v356
    %376 = vmatpush.bf16.msra.mxu0 %v355
    %377 = vmatpush.bf16.msra.mxu0 %v354
    %378 = vmatmul.bf16.gmra.mxu0 %v321
    %v379 = vpop.f32.mrf.mxu0
    %v380 = vadd.f32 %v315, %v379
    %v381 = vpop.f32.mrf.mxu0
    %v382 = vadd.f32 %v315, %v381
    %383 = vdwg.mxu0
    %v384 = vxor.u32 %v380, 2147483648
    %v385 = vxor.u32 %v382, 2147483648
    %v386 = vmul.f32 %v384, 1.442695
    %v387 = vpow.pop %v386
    %v388 = vmul.f32 %v385, 1.442695
    %v389 = vpow.pop %v388
    %v390 = vadd.f32 %v387, 1.0
    %v391 = vadd.f32 %v389, 1.0
    %v392 = vrcp.pop %v390
    %v393 = vmul.f32 %v390, %v392
    %v394 = vsub.f32 1.0, %v393
    %v395 = vmul.f32 %v392, %v394
    %v396 = vadd.f32 %v392, %v395
    %vm397 = vweird.f32 %v390
    %vm398 = vweird.f32 %v392
    %vm399 = vmor %vm397, %vm398
    %v400 = vsel %vm399, %v392, %v396
    %v401 = vand.u32 2147483647, %v390
    %vm402 = vcmp.eq.f32.partialorder %v401, 8.507059e+37
    %v403 = vand.u32 %v390, 2147483648
    %v404 = vor.u32 1.1754944e-38, %v403
    %v405 = vsel %vm402, %v404, %v400
    %v406 = vmul.f32 1.0, %v405
    %v407 = vrcp.pop %v391
    %v408 = vmul.f32 %v391, %v407
    %v409 = vsub.f32 1.0, %v408
    %v410 = vmul.f32 %v407, %v409
    %v411 = vadd.f32 %v407, %v410
    %vm412 = vweird.f32 %v391
    %vm413 = vweird.f32 %v407
    %vm414 = vmor %vm412, %vm413
    %v415 = vsel %vm414, %v407, %v411
    %v416 = vand.u32 2147483647, %v391
    %vm417 = vcmp.eq.f32.partialorder %v416, 8.507059e+37
    %v418 = vand.u32 %v391, 2147483648
    %v419 = vor.u32 1.1754944e-38, %v418
    %v420 = vsel %vm417, %v419, %v415
    %v421 = vmul.f32 1.0, %v420
    %v422 = vld [vmem:[#allocation11] sm:$0xff]
    %v423 = vld [vmem:[#allocation11 + $0x8] sm:$0xff]
    %vm424 = vcmp.lt.f32.partialorder %v422, %v406
    %vm425 = vcmp.lt.f32.partialorder %v423, %v421
    %v426 = vsel %vm424, 1, 0
    %v427 = vsel %vm425, 1, 0
    %v428 = vcvt.s32.f32 %v426
    %v429 = vcvt.s32.f32 %v427
    loop: start=0, step=1, limit=10
    $region70: #{tpu_custom_call.1} parent=1 // loop_pre_header
      _
    $region71: #{tpu_custom_call.1} parent=1 // loop_header
      %s431 = sphi 0, %s435
      %p432 = scmp.ge.s32.totalorder %s431, 10
      %v436 = vphi %v428, %v613
      %v437 = vphi %v429, %v614
      %v438 = vphi %v277, %v549
      %v439 = vphi %v278, %v550
    $region72: #{tpu_custom_call.1} parent=1 // loop_header_branch
      %434 = sbr.rel (%p432) target = $region76
    $region73: #{tpu_custom_call.1} parent=1 // loop_body
      %v440 = vpack.c.bf16 %v437, %v436
      %v457 = vunpack.c.l.b16 %v297
      %v458 = vunpack.c.l.b16 %v298
      %v459 = vunpack.c.l.b16 %v299
      %v460 = vunpack.c.l.b16 %v300
      %v461 = vunpack.c.l.b16 %v301
      %v462 = vunpack.c.l.b16 %v302
      %v463 = vunpack.c.l.b16 %v303
      %v464 = vunpack.c.l.b16 %v304
      %v465 = vunpack.c.l.b16 %v305
      %v466 = vunpack.c.l.b16 %v306
      %v467 = vunpack.c.l.b16 %v307
      %v468 = vunpack.c.l.b16 %v308
      %v469 = vunpack.c.l.b16 %v309
      %v470 = vunpack.c.l.b16 %v310
      %v471 = vunpack.c.l.b16 %v311
      %v472 = vunpack.c.l.b16 %v312
      %v473 = vpack.c.b16 %v458, %v457
      %v474 = vpack.c.b16 %v460, %v459
      %v475 = vpack.c.b16 %v462, %v461
      %v476 = vpack.c.b16 %v464, %v463
      %v477 = vpack.c.b16 %v466, %v465
      %v478 = vpack.c.b16 %v468, %v467
      %v479 = vpack.c.b16 %v470, %v469
      %v480 = vpack.c.b16 %v472, %v471
      %489 = vmatpush.bf16.msra.mxu0 %v480
      %490 = vmatpush.bf16.msra.mxu0 %v479
      %491 = vmatpush.bf16.msra.mxu0 %v478
      %492 = vmatpush.bf16.msra.mxu0 %v477
      %493 = vmatpush.bf16.msra.mxu0 %v476
      %494 = vmatpush.bf16.msra.mxu0 %v475
      %495 = vmatpush.bf16.msra.mxu0 %v474
      %496 = vmatpush.bf16.msra.mxu0 %v473
      %497 = vmatmul.bf16.gmra.mxu0 %v440
      %v498 = vpop.f32.mrf.mxu0
      %v499 = vadd.f32 %v319, %v498
      %v500 = vpop.f32.mrf.mxu0
      %v501 = vadd.f32 %v319, %v500
      %502 = vdwg.mxu0
      %v503 = vxor.u32 %v499, 2147483648
      %v504 = vxor.u32 %v501, 2147483648
      %v505 = vmul.f32 %v503, 1.442695
      %v506 = vpow.pop %v505
      %v507 = vmul.f32 %v504, 1.442695
      %v508 = vpow.pop %v507
      %v509 = vadd.f32 %v506, 1.0
      %v510 = vadd.f32 %v508, 1.0
      %v511 = vrcp.pop %v509
      %v512 = vmul.f32 %v509, %v511
      %v513 = vsub.f32 1.0, %v512
      %v514 = vmul.f32 %v511, %v513
      %v515 = vadd.f32 %v511, %v514
      %vm516 = vweird.f32 %v509
      %vm517 = vweird.f32 %v511
      %vm518 = vmor %vm516, %vm517
      %v519 = vsel %vm518, %v511, %v515
      %v520 = vand.u32 2147483647, %v509
      %vm521 = vcmp.eq.f32.partialorder %v520, 8.507059e+37
      %v522 = vand.u32 %v509, 2147483648
      %v523 = vor.u32 1.1754944e-38, %v522
      %v524 = vsel %vm521, %v523, %v519
      %v525 = vmul.f32 1.0, %v524
      %v526 = vrcp.pop %v510
      %v527 = vmul.f32 %v510, %v526
      %v528 = vsub.f32 1.0, %v527
      %v529 = vmul.f32 %v526, %v528
      %v530 = vadd.f32 %v526, %v529
      %vm531 = vweird.f32 %v510
      %vm532 = vweird.f32 %v526
      %vm533 = vmor %vm531, %vm532
      %v534 = vsel %vm533, %v526, %v530
      %v535 = vand.u32 2147483647, %v510
      %vm536 = vcmp.eq.f32.partialorder %v535, 8.507059e+37
      %v537 = vand.u32 %v510, 2147483648
      %v538 = vor.u32 1.1754944e-38, %v537
      %v539 = vsel %vm536, %v538, %v534
      %v540 = vmul.f32 1.0, %v539
      %s541 = smul.u32 %s431, 16
      %s542 = scalar_lea.vmem [#allocation13], %s541
      %v543 = vld [vmem:[%s542] sm:$0xff]
      %v544 = vld [vmem:[%s542 + $0x8] sm:$0xff]
      %vm545 = vcmp.lt.f32.partialorder %v543, %v525
      %vm546 = vcmp.lt.f32.partialorder %v544, %v540
      %v547 = vsel %vm545, 1, 0
      %v548 = vsel %vm546, 1, 0
      %v549 = vcvt.s32.f32 %v547
      %v550 = vcvt.s32.f32 %v548
      %v551 = vpack.c.bf16 %v550, %v549
      %552 = vmatpush.bf16.msra.mxu0 %v361
      %553 = vmatpush.bf16.msra.mxu0 %v360
      %554 = vmatpush.bf16.msra.mxu0 %v359
      %555 = vmatpush.bf16.msra.mxu0 %v358
      %556 = vmatpush.bf16.msra.mxu0 %v357
      %557 = vmatpush.bf16.msra.mxu0 %v356
      %558 = vmatpush.bf16.msra.mxu0 %v355
      %559 = vmatpush.bf16.msra.mxu0 %v354
      %560 = vmatmul.bf16.gmra.mxu0 %v551
      %v561 = vpop.f32.mrf.mxu0
      %v562 = vadd.f32 %v315, %v561
      %v563 = vpop.f32.mrf.mxu0
      %v564 = vadd.f32 %v315, %v563
      %565 = vdwg.mxu0
      %v566 = vxor.u32 %v562, 2147483648
      %v567 = vxor.u32 %v564, 2147483648
      %v568 = vmul.f32 %v566, 1.442695
      %v569 = vpow.pop %v568
      %v570 = vmul.f32 %v567, 1.442695
      %v571 = vpow.pop %v570
      %v572 = vadd.f32 %v569, 1.0
      %v573 = vadd.f32 %v571, 1.0
      %v574 = vrcp.pop %v572
      %v575 = vmul.f32 %v572, %v574
      %v576 = vsub.f32 1.0, %v575
      %v577 = vmul.f32 %v574, %v576
      %v578 = vadd.f32 %v574, %v577
      %vm579 = vweird.f32 %v572
      %vm580 = vweird.f32 %v574
      %vm581 = vmor %vm579, %vm580
      %v582 = vsel %vm581, %v574, %v578
      %v583 = vand.u32 2147483647, %v572
      %vm584 = vcmp.eq.f32.partialorder %v583, 8.507059e+37
      %v585 = vand.u32 %v572, 2147483648
      %v586 = vor.u32 1.1754944e-38, %v585
      %v587 = vsel %vm584, %v586, %v582
      %v588 = vmul.f32 1.0, %v587
      %v589 = vrcp.pop %v573
      %v590 = vmul.f32 %v573, %v589
      %v591 = vsub.f32 1.0, %v590
      %v592 = vmul.f32 %v589, %v591
      %v593 = vadd.f32 %v589, %v592
      %vm594 = vweird.f32 %v573
      %vm595 = vweird.f32 %v589
      %vm596 = vmor %vm594, %vm595
      %v597 = vsel %vm596, %v589, %v593
      %v598 = vand.u32 2147483647, %v573
      %vm599 = vcmp.eq.f32.partialorder %v598, 8.507059e+37
      %v600 = vand.u32 %v573, 2147483648
      %v601 = vor.u32 1.1754944e-38, %v600
      %v602 = vsel %vm599, %v601, %v597
      %v603 = vmul.f32 1.0, %v602
      %s604 = sadd.s32 %s431, 1
      %s605 = smul.u32 %s604, 16
      %s606 = scalar_lea.vmem [#allocation11], %s605
      %v607 = vld [vmem:[%s606] sm:$0xff]
      %v608 = vld [vmem:[%s606 + $0x8] sm:$0xff]
      %vm609 = vcmp.lt.f32.partialorder %v607, %v588
      %vm610 = vcmp.lt.f32.partialorder %v608, %v603
      %v611 = vsel %vm609, 1, 0
      %v612 = vsel %vm610, 1, 0
      %v613 = vcvt.s32.f32 %v611
      %v614 = vcvt.s32.f32 %v612
    $region74: #{tpu_custom_call.1} parent=1 // loop_footer
      %s435 = sadd.s32 1, %s431
    $region75: #{tpu_custom_call.1} parent=1 // loop_footer_branch
      %430 = sbr.rel target = $region71
    $region76: #{tpu_custom_call.1} parent=1 // loop_exit
      _
    %615 = vst [vmem:[#allocation15] sm:$0xff] %v438
    %616 = vst [vmem:[#allocation15 + $0x8] sm:$0xff] %v439
    // Predicated region
    $region77: #{tpu_custom_call.1} parent=1 // pred_check
      _
    $region78: #{tpu_custom_call.1} parent=1 // pred_check_branch
      %618 = sbr.rel (0) target = $region80
    $region79: #{tpu_custom_call.1} parent=1 // pred_region
      %620 = vsyncadd [#allocation4], 0
      %s621 = sshll.u32 [#allocation14], 4
      %s622 = int_to_ptr.vmem [resolvable:$true] %s621
      %s623 = sshll.u32 %s10, 4
      %s624 = int_to_ptr.hbm [resolvable:$true] %s623
      %629 = dma.vmem_to_hbm [thread:$0]  %s622, 256, %s624, [#allocation4], 128, 128, 8
    $region80: #{tpu_custom_call.1} parent=1 // pred_fallthru
      _
    // Predicated region
    $region81: #{tpu_custom_call.1} parent=1 // pred_check
      _
    $region82: #{tpu_custom_call.1} parent=1 // pred_check_branch
      %631 = sbr.rel (0) target = $region84
    $region83: #{tpu_custom_call.1} parent=1 // pred_region
      %633 = vsyncadd [#allocation16], 0
      %s634 = sshll.u32 [#allocation15], 4
      %s635 = int_to_ptr.vmem [resolvable:$true] %s634
      %s636 = sshll.u32 %s11, 4
      %s637 = int_to_ptr.hbm [resolvable:$true] %s636
      %642 = dma.vmem_to_hbm [thread:$0]  %s635, 256, %s637, [#allocation16], 128, 128, 8
    $region84: #{tpu_custom_call.1} parent=1 // pred_fallthru
      _
    // Predicated region
    $region85: #{tpu_custom_call.1} parent=1 // pred_check
      _
    $region86: #{tpu_custom_call.1} parent=1 // pred_check_branch
      %644 = sbr.rel (0) target = $region88
    $region87: #{tpu_custom_call.1} parent=1 // pred_region
      %646 = dma.done [#allocation4], 256
    $region88: #{tpu_custom_call.1} parent=1 // pred_fallthru
      _
    // Predicated region
    $region89: #{tpu_custom_call.1} parent=1 // pred_check
      _
    $region90: #{tpu_custom_call.1} parent=1 // pred_check_branch
      %648 = sbr.rel (0) target = $region92
    $region91: #{tpu_custom_call.1} parent=1 // pred_region
      %650 = dma.done [#allocation16], 256
    $region92: #{tpu_custom_call.1} parent=1 // pred_fallthru
      _
    %651 = vsyncpa [#allocation3], 1
    %652 = vsyncpa [#allocation6], 1
    %653 = vsyncpa [#allocation9], 1
    %654 = vsyncpa [#allocation12], 1
    %655 = vsyncpa [#allocation4], 1
    %656 = vsyncpa [#allocation16], 1

</llo_original>
